<compile_context>
chip_gen: v7x
topology: tpu7x:2x2x1
jax: 0.10.0
libtpu: 0.0.40
codegen_flags: <defaults>
</compile_context>

<pallas_src>
import jax
import jax.numpy as jnp
from jax.experimental import pallas as pl
from jax.experimental.pallas import tpu as pltpu


def _round_up(a: int, b: int) -> int:
    return -(-a // b) * b


def _add_pos_kernel(x_ref, pos_ref, o_ref):
    # x_ref / o_ref: (B, tr, LANES) tile; pos_ref: (1, tr, LANES) tile that
    # broadcasts over the B leading rows on the VPU. The add happens in the
    # promoted dtype (e.g. bf16 + f32 -> f32) and is cast to the output dtype
    # in-kernel — no separate HBM cast pass.
    o_ref[...] = (x_ref[...] + pos_ref[...]).astype(o_ref.dtype)


def abs_pos_embed(x: jax.Array, pos_embed: jax.Array, *,
                  target_working_set_bytes: int = 8 << 20,
                  donate_x: bool = False) -> jax.Array:
    """y = x + pos_embed (broadcast over batch)."""
    B, L, D = x.shape
    assert pos_embed.shape == (1, L, D), (pos_embed.shape, (1, L, D))

    x_isz = jnp.dtype(x.dtype).itemsize
    p_isz = jnp.dtype(pos_embed.dtype).itemsize
    # Sublane pack for dense vreg tiles (8 for 4-byte, 16 for 2-byte, 32 for 1-byte).
    pack = max(8, 32 // x_isz, 32 // p_isz)

    N = L * D
    if D % 128 == 0 or N % 128 != 0:
        # Natural layout: sublanes <- L, lanes <- D (full extent; masked lane
        # remainder only when D % 128 != 0).
        R, LANES = L, D
        x_v, pos_v = x, pos_embed
    else:
        # Fully lane-dense re-view of the flat (L*D) payload (pure reshape,
        # DMA stays contiguous).
        R, LANES = N // 128, 128
        x_v = x.reshape(B, R, LANES)
        pos_v = pos_embed.reshape(1, R, LANES)

    lanes_padded = _round_up(LANES, 128)
    # Per tiled row, double-buffered: x block + out block + pos block.
    bytes_per_row = 2 * (2 * B * x_isz + p_isz) * lanes_padded
    tr = max(pack, (target_working_set_bytes // bytes_per_row) // pack * pack)
    if R >= 2 * pack:
        # Keep at least 2 grid steps so v7x's second TensorCore gets work.
        tr = min(tr, _round_up(-(-R // 2), pack))
    tr = min(tr, R)           # full-extent block is always legal
    grid_r = pl.cdiv(R, tr)   # trailing partial block is masked by Pallas

    out_dtype = x.dtype
    alias = {0: 0} if donate_x else {}   # reuse x's HBM buffer when donated

    out = pl.pallas_call(
        _add_pos_kernel,
        out_shape=jax.ShapeDtypeStruct((B, R, LANES), out_dtype),
        grid=(grid_r,),
        in_specs=[
            pl.BlockSpec((B, tr, LANES), lambda j: (0, j, 0)),   # x: j-th row chunk
            pl.BlockSpec((1, tr, LANES), lambda j: (0, j, 0)),   # pos: same chunk
        ],
        out_specs=pl.BlockSpec((B, tr, LANES), lambda j: (0, j, 0)),
        compiler_params=pltpu.CompilerParams(
            dimension_semantics=("parallel",),
            vmem_limit_bytes=32 << 20,
        ),
        input_output_aliases=alias,
    )(x_v, pos_v)

    return out.reshape(B, L, D)


def init_pos_embed(key, length: int, embed_dim: int, std: float = 0.02,
                   dtype=jnp.float32) -> jax.Array:
    """Stand-in for nn.Parameter(zeros) + trunc_normal_(std=0.02)."""
    return (std * jax.random.truncated_normal(
        key, -2.0, 2.0, (1, length, embed_dim))).astype(dtype)


if __name__ == "__main__":
    key = jax.random.PRNGKey(0)
    ks = jax.random.split(key, 6)

    # --- primary small check (batch=2, seq=8, hidden=32), f32 -----------------
    B, L, D = 2, 8, 32
    x = jax.random.normal(ks[0], (B, L, D), dtype=jnp.float32)
    pos = init_pos_embed(ks[1], L, D)
    y = abs_pos_embed(x, pos)
    jax.block_until_ready(y)
    y_ref = x + pos
    assert y.shape == (B, L, D) and y.dtype == x.dtype
    assert jnp.allclose(y, y_ref, atol=1e-6), "mismatch vs reference (f32)"

    # --- aliased-output path (donated x buffer) -------------------------------
    y_alias = abs_pos_embed(x, pos, donate_x=True)
    jax.block_until_ready(y_alias)
    assert jnp.allclose(y_alias, y_ref, atol=1e-6), "mismatch (donate_x)"

    # --- lane-dense re-view path: bf16 x + f32 pos, multi-step grid with a
    #     masked trailing block ------------------------------------------------
    B2, L2, D2 = 2, 68, 192                      # L*D = 13056 -> (102, 128)
    x2 = jax.random.normal(ks[2], (B2, L2, D2), dtype=jnp.bfloat16)
    pos2 = init_pos_embed(ks[3], L2, D2)         # f32 parameter, cast in-kernel
    y2 = abs_pos_embed(x2, pos2, target_working_set_bytes=64 * 1024)
    jax.block_until_ready(y2)
    y2_ref = (x2.astype(jnp.float32) + pos2).astype(jnp.bfloat16)
    assert y2.shape == (B2, L2, D2) and y2.dtype == jnp.bfloat16
    assert jnp.allclose(y2.astype(jnp.float32), y2_ref.astype(jnp.float32),
                        atol=1e-2), "mismatch vs reference (bf16, tiled)"

    # --- natural-layout fallback: D not a multiple of 128 (masked lanes) ------
    B3, L3, D3 = 3, 20, 48                       # L*D = 960, not % 128
    x3 = jax.random.normal(ks[4], (B3, L3, D3), dtype=jnp.float32)
    pos3 = init_pos_embed(ks[5], L3, D3)
    y3 = abs_pos_embed(x3, pos3, target_working_set_bytes=64 * 1024)
    jax.block_until_ready(y3)
    assert jnp.allclose(y3, x3 + pos3, atol=1e-6), "mismatch (natural layout)"

    print("KERNEL_OK")
</pallas_src>

<mosaic_0001>
module attributes {stable_mosaic.version = 11 : i64} {
  func.func @_add_pos_kernel(%arg0: i32, %arg1: memref<2x2x128xf32, #tpu.memory_space<vmem>>, %arg2: memref<1x2x128xf32, #tpu.memory_space<vmem>>, %arg3: memref<2x2x128xf32, #tpu.memory_space<vmem>>) attributes {dimension_semantics = [#tpu.dimension_semantics<parallel>], iteration_bounds = array<i64: 1>, scalar_prefetch = 0 : i64, scratch_operands = 0 : i64, tpu.core_type = #tpu.core_type<tc>, window_params = [{transform_indices = @transform_0, window_bounds = array<i64: 2, 2, 128>}, {transform_indices = @transform_1, window_bounds = array<i64: 1, 2, 128>}, {transform_indices = @transform_2, window_bounds = array<i64: 2, 2, 128>}]} {
    %c0 = arith.constant 0 : index
    %c0_0 = arith.constant 0 : index
    %c0_1 = arith.constant 0 : index
    %0 = vector.load %arg1[%c0, %c0_0, %c0_1] : memref<2x2x128xf32, #tpu.memory_space<vmem>>, vector<2x2x128xf32>
    %c0_2 = arith.constant 0 : index
    %c0_3 = arith.constant 0 : index
    %c0_4 = arith.constant 0 : index
    %1 = vector.load %arg2[%c0_2, %c0_3, %c0_4] : memref<1x2x128xf32, #tpu.memory_space<vmem>>, vector<1x2x128xf32>
    %2 = vector.broadcast %1 : vector<1x2x128xf32> to vector<2x2x128xf32>
    %3 = arith.addf %0, %2 : vector<2x2x128xf32>
    %c0_5 = arith.constant 0 : index
    %c0_6 = arith.constant 0 : index
    %c0_7 = arith.constant 0 : index
    %4 = vector.load %arg3[%c0_5, %c0_6, %c0_7] : memref<2x2x128xf32, #tpu.memory_space<vmem>>, vector<2x2x128xf32>
    tpu.vector_store %arg3[%c0_5, %c0_6, %c0_7], %3 {strides = array<i32>} : memref<2x2x128xf32, #tpu.memory_space<vmem>>, vector<2x2x128xf32>,
    return
  }
  func.func @transform_0(%arg0: i32) -> (i32, i32, i32) {
    %c0_i32 = arith.constant 0 : i32
    %c0_i32_0 = arith.constant 0 : i32
    %c0_i32_1 = arith.constant 0 : i32
    return %c0_i32, %arg0, %c0_i32_0 : i32, i32, i32
  }
  func.func @transform_1(%arg0: i32) -> (i32, i32, i32) {
    %c0_i32 = arith.constant 0 : i32
    %c0_i32_0 = arith.constant 0 : i32
    %c0_i32_1 = arith.constant 0 : i32
    return %c0_i32, %arg0, %c0_i32_0 : i32, i32, i32
  }
  func.func @transform_2(%arg0: i32) -> (i32, i32, i32) {
    %c0_i32 = arith.constant 0 : i32
    %c0_i32_0 = arith.constant 0 : i32
    %c0_i32_1 = arith.constant 0 : i32
    return %c0_i32, %arg0, %c0_i32_0 : i32, i32, i32
  }
}

</mosaic_0001>

<llo_original>
// kernel: tpu_custom_call.1
$region0: #{tpu_custom_call.1}
  #allocation0 [shape = 'u32[]', space=smem, size = 0x4, offset = 0x4, fixed_abs, tag = 'smem constant byte address 0x4 - core index']
  #allocation1 [shape = 'u32[144,128]{1,0:T(1,128)}', space=vmem, size = 0x12000, scoped, tag = 'internal scratch']
  %s0 = inlined_call_operand.hbm [shape: f32[2,2,128], index: 0, kind: input, shape index: {}]
  %s1 = inlined_call_operand.vmem [shape: f32[1,2,128], index: 1, kind: input, shape index: {}]
  %s2 = inlined_call_operand.hbm [shape: f32[2,2,128], index: 2, kind: output, shape index: {}]
  %s3 = sld [smem:[#allocation0]]
  $region22: #{tpu_custom_call.1} parent=0
    _
  %s5 = ssub.s32 1, %s3
  %s6 = scalar_select 0, %s5, %s3
  $region1: #{tpu_custom_call.1} parent=0
    #allocation2 [shape = 'u8[2048]{0}', space=vmem, size = 0x800, scoped, tag = 'input window, operand 0, single buffered']
    #allocation3 [shape = 's32[1]{0}', space=sflag, size = 0x4, scoped, tag = 'scoped memory for tpu_custom_call.1']
    #allocation4 [shape = 's32[1]{0}', space=sflag, size = 0x4, scoped, tag = 'scoped memory for tpu_custom_call.1']
    #allocation5 [shape = 'u8[2048]{0}', space=vmem, size = 0x800, scoped, tag = 'output window, operand 0, single buffered']
    %7 = vsyncpa [#allocation3], 0
    %8 = vsyncpa [#allocation4], 0
    // Predicated region
    $region2: #{tpu_custom_call.1} parent=1 // pred_check
      _
    $region3: #{tpu_custom_call.1} parent=1 // pred_check_branch
      %10 = sbr.rel (0) target = $region5
    $region4: #{tpu_custom_call.1} parent=1 // pred_region
      %s12 = ssub.s32 64, 64
      %13 = vsyncadd [#allocation3], %s12
      %s14 = sshll.u32 [#allocation2], 4
      %s15 = int_to_ptr.vmem [resolvable:$true] %s14
      %20 = dma.hbm_to_vmem [thread:$0]  %s0, 64, %s15, [#allocation3], 32, 32, 2
    $region5: #{tpu_custom_call.1} parent=1 // pred_fallthru
      _
    // Predicated region
    $region6: #{tpu_custom_call.1} parent=1 // pred_check
      _
    $region7: #{tpu_custom_call.1} parent=1 // pred_check_branch
      %22 = sbr.rel (0) target = $region9
    $region8: #{tpu_custom_call.1} parent=1 // pred_region
      _
    $region9: #{tpu_custom_call.1} parent=1 // pred_fallthru
      _
    // Predicated region
    $region10: #{tpu_custom_call.1} parent=1 // pred_check
      _
    $region11: #{tpu_custom_call.1} parent=1 // pred_check_branch
      %24 = sbr.rel (0) target = $region13
    $region12: #{tpu_custom_call.1} parent=1 // pred_region
      %25 = dma.done [#allocation3], 64
    $region13: #{tpu_custom_call.1} parent=1 // pred_fallthru
      _
    %v26 = vld [vmem:[#allocation2] sm:$0x3]
    %v27 = vld [vmem:[#allocation2 + $0x2] sm:$0x3]
    %v28 = vld [vmem:[%s1] sm:$0x3]
    %v29 = vadd.f32 %v26, %v28
    %v30 = vadd.f32 %v27, %v28
    %31 = vst [vmem:[#allocation5] sm:$0x3] %v29
    %32 = vst [vmem:[#allocation5 + $0x2] sm:$0x3] %v30
    // Predicated region
    $region14: #{tpu_custom_call.1} parent=1 // pred_check
      _
    $region15: #{tpu_custom_call.1} parent=1 // pred_check_branch
      %34 = sbr.rel (0) target = $region17
    $region16: #{tpu_custom_call.1} parent=1 // pred_region
      %s36 = ssub.s32 64, 64
      %37 = vsyncadd [#allocation4], %s36
      %s38 = sshll.u32 [#allocation5], 4
      %s39 = int_to_ptr.vmem [resolvable:$true] %s38
      %44 = dma.vmem_to_hbm [thread:$0]  %s39, 64, %s2, [#allocation4], 32, 32, 2
    $region17: #{tpu_custom_call.1} parent=1 // pred_fallthru
      _
    // Predicated region
    $region18: #{tpu_custom_call.1} parent=1 // pred_check
      _
    $region19: #{tpu_custom_call.1} parent=1 // pred_check_branch
      %46 = sbr.rel (0) target = $region21
    $region20: #{tpu_custom_call.1} parent=1 // pred_region
      %47 = dma.done [#allocation4], 64
    $region21: #{tpu_custom_call.1} parent=1 // pred_fallthru
      _
    %48 = vsyncpa [#allocation3], 1
    %49 = vsyncpa [#allocation4], 1

</llo_original>
